<compile_context>
chip_gen: v7x
topology: tpu7x:2x2x1
jax: 0.10.0
libtpu: 0.0.40
codegen_flags: <defaults>
</compile_context>

<pallas_src>
import functools

import jax
import jax.numpy as jnp
from jax import lax
from jax.experimental import pallas as pl
from jax.experimental.pallas import tpu as pltpu


def _round_up(x, m):
    return ((x + m - 1) // m) * m


def _gemm_bn_relu_kernel(x_ref, w_ref, bias_ref, o_ref, *, relu6):
    """One (batch, Cout-tile, M-tile) grid step: out = act(x @ w + bias).

    x_ref    : (TM, K_pad)     im2col activation rows, bf16
    w_ref    : (K_pad, TCout)  BN-scale-folded weights, bf16
    bias_ref : (1, TCout)      folded BN bias, f32
    o_ref    : (TM, TCout)     output tile
    """
    y = jnp.dot(x_ref[...], w_ref[...], preferred_element_type=jnp.float32)
    y = y + bias_ref[...]
    y = jnp.maximum(y, 0.0)
    if relu6:
        y = jnp.minimum(y, 6.0)
    o_ref[...] = y.astype(o_ref.dtype)


def conv_bn_relu(x_nchw, weight, gamma, beta, running_mean, running_var,
                 *, stride=1, padding=1, eps=1e-5, use_relu6=False,
                 compute_dtype=jnp.bfloat16):
    """Matches Conv(in_c, out_c, k, stride, padding).forward in eval mode.

    x_nchw : (N, Cin, H, W)      weight : (Cout, Cin, KH, KW)   (PyTorch layouts)
    """
    N, Cin, H, W = x_nchw.shape
    Cout, _, KH, KW = weight.shape
    H_out = (H + 2 * padding - KH) // stride + 1
    W_out = (W + 2 * padding - KW) // stride + 1
    M = H_out * W_out
    K = KH * KW * Cin

    # ---- tiling choices --------------------------------------------------------
    k_pad = _round_up(K, 8)                               # sublane-clean contraction dim
    cout_pad = _round_up(Cout, 128)                       # lane-dense output channels
    tcout = 256 if cout_pad % 256 == 0 else 128
    tm = min(512, _round_up(max(M, 1), 256))              # MXU-sized M tile (>=256)
    m_pad = _round_up(M, tm)
    n_m = m_pad // tm
    n_c = cout_pad // tcout

    # ---- BN folding (eval / running stats), scale folded into the weights -------
    scale = gamma / jnp.sqrt(running_var + eps)           # (Cout,)
    bias = beta - running_mean * scale                    # (Cout,)
    w = weight * scale[:, None, None, None]               # (Cout, Cin, KH, KW)
    w_mat = jnp.transpose(w, (2, 3, 1, 0)).reshape(K, Cout)      # (KH*KW*Cin, Cout)
    w_mat = jnp.pad(w_mat, ((0, k_pad - K), (0, cout_pad - Cout))).astype(compute_dtype)
    bias_p = jnp.pad(bias, (0, cout_pad - Cout)).reshape(1, cout_pad).astype(jnp.float32)

    # ---- input: NCHW -> NHWC, spatial pad, full im2col repack (K = KH*KW*Cin) ----
    x_nhwc = jnp.transpose(x_nchw, (0, 2, 3, 1))
    x_sp = jnp.pad(x_nhwc, ((0, 0), (padding, padding), (padding, padding), (0, 0)))
    cols = []
    for kh in range(KH):
        for kw in range(KW):
            cols.append(x_sp[:, kh:kh + (H_out - 1) * stride + 1:stride,
                             kw:kw + (W_out - 1) * stride + 1:stride, :])
    x_col = jnp.concatenate(cols, axis=-1)                # (N, H_out, W_out, K)
    x_col = x_col.reshape(N, M, K)
    x_col = jnp.pad(x_col, ((0, 0), (0, m_pad - M), (0, k_pad - K))).astype(compute_dtype)

    out_dtype = x_nchw.dtype
    out_itemsize = jnp.dtype(out_dtype).itemsize
    in_itemsize = jnp.dtype(compute_dtype).itemsize

    # VMEM budget derived from the actual (double-buffered) blocks, v7x-safe (<= 64 MiB).
    blk_bytes = ((tm * k_pad + k_pad * tcout) * in_itemsize
                 + tcout * 4 + tm * tcout * out_itemsize)
    vmem_limit = int(min(max(4 * blk_bytes + (8 << 20), 32 << 20), 64 << 20))

    cost = pl.CostEstimate(
        flops=2 * N * m_pad * k_pad * cout_pad,
        transcendentals=0,
        bytes_accessed=(N * m_pad * k_pad * in_itemsize
                        + k_pad * cout_pad * in_itemsize
                        + cout_pad * 4
                        + N * m_pad * cout_pad * out_itemsize),
    )

    kernel = functools.partial(_gemm_bn_relu_kernel, relu6=use_relu6)

    out = pl.pallas_call(
        kernel,
        out_shape=jax.ShapeDtypeStruct((N, m_pad, cout_pad), out_dtype),
        grid_spec=pltpu.PrefetchScalarGridSpec(
            num_scalar_prefetch=0,
            # Cout-tile axis OUTSIDE the M-tile axis: weight/bias blocks are fetched
            # once per (batch, Cout-tile) and stay resident across the inner M sweep.
            grid=(N, n_c, n_m),
            in_specs=[
                pl.BlockSpec((None, tm, k_pad), lambda b, c, m: (b, m, 0)),
                pl.BlockSpec((k_pad, tcout), lambda b, c, m: (0, c)),
                pl.BlockSpec((1, tcout), lambda b, c, m: (0, c)),
            ],
            out_specs=pl.BlockSpec((None, tm, tcout), lambda b, c, m: (b, m, c)),
        ),
        compiler_params=pltpu.CompilerParams(
            dimension_semantics=("parallel", "parallel", "parallel"),
            vmem_limit_bytes=vmem_limit,
        ),
        cost_estimate=cost,
    )(x_col, w_mat, bias_p)

    # drop M / channel padding, back to NCHW to match the PyTorch module interface
    out = out[:, :M, :Cout].reshape(N, H_out, W_out, Cout)
    return jnp.transpose(out, (0, 3, 1, 2))


def _reference(x, weight, gamma, beta, mean, var, *, stride, padding, eps, use_relu6):
    y = lax.conv_general_dilated(
        x, weight, window_strides=(stride, stride),
        padding=((padding, padding), (padding, padding)),
        dimension_numbers=("NCHW", "OIHW", "NCHW"),
        precision=lax.Precision.HIGHEST)
    s = gamma / jnp.sqrt(var + eps)
    y = y * s.reshape(1, -1, 1, 1) + (beta - mean * s).reshape(1, -1, 1, 1)
    y = jnp.maximum(y, 0.0)
    if use_relu6:
        y = jnp.minimum(y, 6.0)
    return y


if __name__ == "__main__":
    # Small shapes consistent with the module: batch=2, in_c=4, out_c=8, 16x16 spatial.
    N, Cin, Cout, H, W = 2, 4, 8, 16, 16
    key = jax.random.PRNGKey(0)
    kx, kw_, kg, kb, km, kv = jax.random.split(key, 6)

    x = jax.random.normal(kx, (N, Cin, H, W), dtype=jnp.float32)
    weight = jax.random.normal(kw_, (Cout, Cin, 3, 3), dtype=jnp.float32) * 0.1
    gamma = 1.0 + 0.1 * jax.random.normal(kg, (Cout,), dtype=jnp.float32)
    beta = 0.1 * jax.random.normal(kb, (Cout,), dtype=jnp.float32)
    running_mean = 0.1 * jax.random.normal(km, (Cout,), dtype=jnp.float32)
    running_var = jnp.abs(1.0 + 0.1 * jax.random.normal(kv, (Cout,), dtype=jnp.float32))

    out = conv_bn_relu(x, weight, gamma, beta, running_mean, running_var,
                       stride=1, padding=1, use_relu6=False)
    out = jax.block_until_ready(out)

    ref = _reference(x, weight, gamma, beta, running_mean, running_var,
                     stride=1, padding=1, eps=1e-5, use_relu6=False)
    assert out.shape == (N, Cout, H, W)
    # bf16 input/weight cast -> compare against f32 reference with bf16-level tolerance
    assert jnp.allclose(out, ref, atol=5e-2, rtol=5e-2), (
        "mismatch vs reference conv, max abs err = "
        f"{float(jnp.max(jnp.abs(out - ref)))}")

    print("KERNEL_OK")
</pallas_src>

<mosaic_0001>
module attributes {stable_mosaic.version = 11 : i64} {
  func.func @_gemm_bn_relu_kernel(%arg0: i32, %arg1: i32, %arg2: i32, %arg3: memref<1x256x40xbf16, #tpu.memory_space<vmem>>, %arg4: memref<40x128xbf16, #tpu.memory_space<vmem>>, %arg5: memref<1x128xf32, #tpu.memory_space<vmem>>, %arg6: memref<1x256x128xf32, #tpu.memory_space<vmem>>) attributes {dimension_semantics = [#tpu.dimension_semantics<parallel>, #tpu.dimension_semantics<parallel>, #tpu.dimension_semantics<parallel>], iteration_bounds = array<i64: 2, 1, 1>, scalar_prefetch = 0 : i64, scratch_operands = 0 : i64, tpu.core_type = #tpu.core_type<tc>, window_params = [{transform_indices = @transform_0, window_bounds = array<i64: 1, 256, 40>}, {transform_indices = @transform_1, window_bounds = array<i64: 40, 128>}, {transform_indices = @transform_2, window_bounds = array<i64: 1, 128>}, {transform_indices = @transform_3, window_bounds = array<i64: 1, 256, 128>}]} {
    %c0 = arith.constant 0 : index
    %c0_0 = arith.constant 0 : index
    %c0_1 = arith.constant 0 : index
    %0 = vector.load %arg3[%c0, %c0_0, %c0_1] : memref<1x256x40xbf16, #tpu.memory_space<vmem>>, vector<1x256x40xbf16>
    %1 = vector.shape_cast %0 : vector<1x256x40xbf16> to vector<256x40xbf16>
    %c0_2 = arith.constant 0 : index
    %c0_3 = arith.constant 0 : index
    %2 = vector.load %arg4[%c0_2, %c0_3] : memref<40x128xbf16, #tpu.memory_space<vmem>>, vector<40x128xbf16>
    %cst = arith.constant dense<0.000000e+00> : vector<256x128xf32>
    %3 = tpu.matmul %1, %2, %cst {dimension_numbers = #tpu.dot_dimension_numbers<[1], [0], [0], [1], [0, 0, 1, 1], [], []>} : vector<256x40xbf16>, vector<40x128xbf16>, vector<256x128xf32> -> vector<256x128xf32>
    %c0_4 = arith.constant 0 : index
    %c0_5 = arith.constant 0 : index
    %4 = vector.load %arg5[%c0_4, %c0_5] : memref<1x128xf32, #tpu.memory_space<vmem>>, vector<1x128xf32>
    %5 = vector.broadcast %4 : vector<1x128xf32> to vector<256x128xf32>
    %6 = arith.addf %3, %5 : vector<256x128xf32>
    %cst_6 = arith.constant 0.000000e+00 : f32
    %7 = vector.broadcast %cst_6 : f32 to vector<256x128xf32>
    %8 = arith.maximumf %6, %7 : vector<256x128xf32>
    %c0_7 = arith.constant 0 : index
    %c0_8 = arith.constant 0 : index
    %c0_9 = arith.constant 0 : index
    %9 = vector.load %arg6[%c0_7, %c0_8, %c0_9] : memref<1x256x128xf32, #tpu.memory_space<vmem>>, vector<1x256x128xf32>
    %10 = vector.shape_cast %9 : vector<1x256x128xf32> to vector<256x128xf32>
    %11 = vector.shape_cast %8 : vector<256x128xf32> to vector<1x256x128xf32>
    tpu.vector_store %arg6[%c0_7, %c0_8, %c0_9], %11 {strides = array<i32>} : memref<1x256x128xf32, #tpu.memory_space<vmem>>, vector<1x256x128xf32>,
    return
  }
  func.func @transform_0(%arg0: i32, %arg1: i32, %arg2: i32) -> (i32, i32, i32) {
    %c0_i32 = arith.constant 0 : i32
    %c0_i32_0 = arith.constant 0 : i32
    return %arg0, %arg2, %c0_i32 : i32, i32, i32
  }
  func.func @transform_1(%arg0: i32, %arg1: i32, %arg2: i32) -> (i32, i32) {
    %c0_i32 = arith.constant 0 : i32
    %c0_i32_0 = arith.constant 0 : i32
    return %c0_i32, %arg1 : i32, i32
  }
  func.func @transform_2(%arg0: i32, %arg1: i32, %arg2: i32) -> (i32, i32) {
    %c0_i32 = arith.constant 0 : i32
    %c0_i32_0 = arith.constant 0 : i32
    return %c0_i32, %arg1 : i32, i32
  }
  func.func @transform_3(%arg0: i32, %arg1: i32, %arg2: i32) -> (i32, i32, i32) {
    %c0_i32 = arith.constant 0 : i32
    return %arg0, %arg2, %arg1 : i32, i32, i32
  }
}

</mosaic_0001>

<llo_original>
// kernel: tpu_custom_call.1
$region0: #{tpu_custom_call.1}
  #allocation0 [shape = 'u32[]', space=smem, size = 0x4, offset = 0x4, fixed_abs, tag = 'smem constant byte address 0x4 - core index']
  #allocation1 [shape = 'u32[144,128]{1,0:T(1,128)}', space=vmem, size = 0x12000, scoped, tag = 'internal scratch']
  %s0 = inlined_call_operand.vmem [shape: bf16[2,256,40], index: 0, kind: input, shape index: {}]
  %s1 = inlined_call_operand.vmem [shape: bf16[40,128], index: 1, kind: input, shape index: {}]
  %s2 = inlined_call_operand.vmem [shape: f32[1,128], index: 2, kind: input, shape index: {}]
  %s3 = inlined_call_operand.hbm [shape: f32[2,256,128], index: 3, kind: output, shape index: {}]
  %s4 = sld [smem:[#allocation0]]
  $region45: #{tpu_custom_call.1} parent=0
    _
  %s6 = ssub.s32 1, %s4
  %s7 = scalar_select 0, %s6, %s4
  $region1: #{tpu_custom_call.1} parent=0
    #allocation2 [shape = 'u8[262144]{0}', space=vmem, size = 0x40000, scoped, tag = 'output window, operand 0']
    #allocation3 [shape = 's32[2]{0}', space=sflag, size = 0x8, scoped, tag = 'scoped memory for tpu_custom_call.1']
    %8 = vsyncpa [#allocation3], 0
    %s9 = scalar_lea.sflag [#allocation3], 1
    %10 = vsyncpa %s9, 0
    loop: start=0, step=1, limit=4
    $region2: #{tpu_custom_call.1} parent=1 // loop_pre_header
      _
    $region3: #{tpu_custom_call.1} parent=1 // loop_header
      %s12 = sphi 0, %s16
      %p13 = scmp.ge.s32.totalorder %s12, 4
      %s19 = sphi 0, %s38
      %s20 = sphi 0, %s34
      %s21 = sphi 0, %s30
      %s22 = sphi 0, %s19
      %s23 = sphi 0, %s20
      %s24 = sphi 0, %s21
      %s25 = sphi 0, %s22
      %s26 = sphi 0, %s23
      %s27 = sphi 0, %s24
      %s43 = sphi 0, %s45
      %s46 = sphi 0, %s43
      %s47 = sphi 0, %s46
      %s63 = sphi 0, %s47
      %s69 = sphi 0, %s71
      %s72 = sphi 0, %s69
      %s73 = sphi 0, %s72
      %s89 = sphi 0, %s73
      %s95 = sphi 0, %s97
      %s98 = sphi 0, %s95
      %s99 = sphi 0, %s98
      %s115 = sphi 0, %s99
      %s125 = sphi 0, %s127
      %s128 = sphi 0, %s125
      %s129 = sphi 0, %s128
      %s145 = sphi 0, %s129
    $region4: #{tpu_custom_call.1} parent=1 // loop_header_branch
      %15 = sbr.rel (%p13) target = $region8
    $region5: #{tpu_custom_call.1} parent=1 // loop_body
      %s17 = ssub.s32 %s12, 1
      %s18 = ssub.s32 %s12, 2
      %s28 = sadd.s32 1, %s21
      %p29 = scmp.ge.s32.totalorder %s28, 1
      %s30 = scalar_select %p29, 0, %s28
      %s31 = sadd.s32 1, %s20
      %s32 = scalar_select %p29, %s31, %s20
      %p33 = scmp.ge.s32.totalorder %s32, 1
      %s34 = scalar_select %p33, 0, %s32
      %s35 = sadd.s32 1, %s19
      %s36 = scalar_select %p33, %s35, %s19
      %p37 = scmp.ge.s32.totalorder %s36, 2
      %s38 = scalar_select %p37, 0, %s36
      %s39 = ssub.s32 %s19, %s38
      %s40 = ssub.s32 %s21, %s30
      %s41 = sor.u32 %s39, %s40
      %p42 = scmp.eq.s32.totalorder %s41, 0
      %s44 = sadd.s32 %s43, 1
      %s45 = scalar_select %p42, %s43, %s44
      %p48 = pneg %p42
      %p49 = scmp.eq.s32.totalorder %s12, 1
      %p50 = por %p48, %p49
      %p51 = scmp.ne.s32.totalorder %s43, %s46
      %p52 = scmp.eq.s32.totalorder %s12, 0
      %p53 = por %p51, %p52
      %p54 = scmp.ne.s32.totalorder %s43, %s46
      %p55 = scmp.eq.s32.totalorder %s17, 1
      %p56 = por %p54, %p55
      %p57 = scmp.ne.s32.totalorder %s46, %s47
      %p58 = scmp.eq.s32.totalorder %s17, 0
      %p59 = por %p57, %p58
      %p60 = scmp.ne.s32.totalorder %s46, %s47
      %p61 = scmp.eq.s32.totalorder %s18, 1
      %p62 = por %p60, %p61
      %p64 = scmp.ne.s32.totalorder %s47, %s63
      %p65 = scmp.eq.s32.totalorder %s18, 0
      %p66 = por %p64, %p65
      %s67 = ssub.s32 %s20, %s34
      %p68 = scmp.eq.s32.totalorder %s67, 0
      %s70 = sadd.s32 %s69, 1
      %s71 = scalar_select %p68, %s69, %s70
      %p74 = pneg %p68
      %p75 = scmp.eq.s32.totalorder %s12, 1
      %p76 = por %p74, %p75
      %p77 = scmp.ne.s32.totalorder %s69, %s72
      %p78 = scmp.eq.s32.totalorder %s12, 0
      %p79 = por %p77, %p78
      %p80 = scmp.ne.s32.totalorder %s69, %s72
      %p81 = scmp.eq.s32.totalorder %s17, 1
      %p82 = por %p80, %p81
      %p83 = scmp.ne.s32.totalorder %s72, %s73
      %p84 = scmp.eq.s32.totalorder %s17, 0
      %p85 = por %p83, %p84
      %p86 = scmp.ne.s32.totalorder %s72, %s73
      %p87 = scmp.eq.s32.totalorder %s18, 1
      %p88 = por %p86, %p87
      %p90 = scmp.ne.s32.totalorder %s73, %s89
      %p91 = scmp.eq.s32.totalorder %s18, 0
      %p92 = por %p90, %p91
      %s93 = ssub.s32 %s20, %s34
      %p94 = scmp.eq.s32.totalorder %s93, 0
      %s96 = sadd.s32 %s95, 1
      %s97 = scalar_select %p94, %s95, %s96
      %p100 = pneg %p94
      %p101 = scmp.eq.s32.totalorder %s12, 1
      %p102 = por %p100, %p101
      %p103 = scmp.ne.s32.totalorder %s95, %s98
      %p104 = scmp.eq.s32.totalorder %s12, 0
      %p105 = por %p103, %p104
      %p106 = scmp.ne.s32.totalorder %s95, %s98
      %p107 = scmp.eq.s32.totalorder %s17, 1
      %p108 = por %p106, %p107
      %p109 = scmp.ne.s32.totalorder %s98, %s99
      %p110 = scmp.eq.s32.totalorder %s17, 0
      %p111 = por %p109, %p110
      %p112 = scmp.ne.s32.totalorder %s98, %s99
      %p113 = scmp.eq.s32.totalorder %s18, 1
      %p114 = por %p112, %p113
      %p116 = scmp.ne.s32.totalorder %s99, %s115
      %p117 = scmp.eq.s32.totalorder %s18, 0
      %p118 = por %p116, %p117
      %s119 = ssub.s32 %s19, %s38
      %s120 = ssub.s32 %s21, %s30
      %s121 = sor.u32 %s119, %s120
      %s122 = ssub.s32 %s20, %s34
      %s123 = sor.u32 %s121, %s122
      %p124 = scmp.eq.s32.totalorder %s123, 0
      %s126 = sadd.s32 %s125, 1
      %s127 = scalar_select %p124, %s125, %s126
      %p130 = pneg %p124
      %p131 = scmp.eq.s32.totalorder %s12, 1
      %p132 = por %p130, %p131
      %p133 = scmp.ne.s32.totalorder %s125, %s128
      %p134 = scmp.eq.s32.totalorder %s12, 0
      %p135 = por %p133, %p134
      %p136 = scmp.ne.s32.totalorder %s125, %s128
      %p137 = scmp.eq.s32.totalorder %s17, 1
      %p138 = por %p136, %p137
      %p139 = scmp.ne.s32.totalorder %s128, %s129
      %p140 = scmp.eq.s32.totalorder %s17, 0
      %p141 = por %p139, %p140
      %p142 = scmp.ne.s32.totalorder %s128, %s129
      %p143 = scmp.eq.s32.totalorder %s18, 1
      %p144 = por %p142, %p143
      %p146 = scmp.ne.s32.totalorder %s129, %s145
      %p147 = scmp.eq.s32.totalorder %s18, 0
      %p148 = por %p146, %p147
      %p149 = scmp.le.s32.totalorder 1, %s12
      %p150 = scmp.lt.s32.totalorder %s12, 3
      %p151 = pnand %p149, %p150
      %p152 = pneg %p151
      // Predicated region
      $region9: #{tpu_custom_call.1} parent=5 // pred_check
        _
      $region10: #{tpu_custom_call.1} parent=5 // pred_check_branch
        %154 = sbr.rel (%p151) target = $region12
      $region11: #{tpu_custom_call.1} parent=5 // pred_region
        %s155 = ssub.s32 %s12, 1
        // Predicated region
        $region13: #{tpu_custom_call.1} parent=11 // pred_check
          %p156 = pneg %p85
        $region14: #{tpu_custom_call.1} parent=11 // pred_check_branch
          %158 = sbr.rel (%p156) target = $region16
        $region15: #{tpu_custom_call.1} parent=11 // pred_region
          %p159 = scmp.lt.s32.totalorder %s23, 0
          %s160 = scalar_select %p159, %s23, 0
          %s161 = smul.addr %s160, 4
          %s162 = scalar_lea.vmem %s1, %s161
        $region16: #{tpu_custom_call.1} parent=11 // pred_fallthru
          _
        // Predicated region
        $region17: #{tpu_custom_call.1} parent=11 // pred_check
          %p163 = pneg %p111
        $region18: #{tpu_custom_call.1} parent=11 // pred_check_branch
          %165 = sbr.rel (%p163) target = $region20
        $region19: #{tpu_custom_call.1} parent=11 // pred_region
          %p166 = scmp.lt.s32.totalorder %s23, 0
          %s167 = scalar_select %p166, %s23, 0
          %s168 = scalar_lea.vmem %s2, %s167
        $region20: #{tpu_custom_call.1} parent=11 // pred_fallthru
          _
      $region12: #{tpu_custom_call.1} parent=5 // pred_fallthru
        _
      %p169 = scmp.lt.s32.totalorder %s12, 2
      // Predicated region
      $region21: #{tpu_custom_call.1} parent=5 // pred_check
        %p170 = pneg %p169
      $region22: #{tpu_custom_call.1} parent=5 // pred_check_branch
        %172 = sbr.rel (%p170) target = $region24
      $region23: #{tpu_custom_call.1} parent=5 // pred_region
        // Predicated region
        $region25: #{tpu_custom_call.1} parent=23 // pred_check
          %p173 = pneg %p53
        $region26: #{tpu_custom_call.1} parent=23 // pred_check_branch
          %175 = sbr.rel (%p173) target = $region28
        $region27: #{tpu_custom_call.1} parent=23 // pred_region
          %s176 = smul.u32 32, %s21
          %p177 = scmp.lt.s32.totalorder %s19, 1
          %s178 = scalar_select %p177, %s19, 1
          %p179 = scmp.lt.s32.totalorder %s176, 31
          %s180 = scalar_select %p179, %s176, 31
          %s181 = smul.addr %s178, 32
          %s182 = sadd.s32 %s180, %s181
          %s183 = smul.addr %s182, 4
          %s184 = scalar_lea.vmem %s0, %s183
          %s185 = smul.u32 32, %s21
        $region28: #{tpu_custom_call.1} parent=23 // pred_fallthru
          _
      $region24: #{tpu_custom_call.1} parent=5 // pred_fallthru
        _
      %p186 = scmp.le.s32.totalorder 1, %s12
      %p187 = scmp.lt.s32.totalorder %s12, 3
      %p188 = pnand %p186, %p187
      %p189 = pneg %p188
      // Predicated region
      $region29: #{tpu_custom_call.1} parent=5 // pred_check
        _
      $region30: #{tpu_custom_call.1} parent=5 // pred_check_branch
        %191 = sbr.rel (%p188) target = $region32
      $region31: #{tpu_custom_call.1} parent=5 // pred_region
        %s192 = ssub.s32 %s12, 1
        %s193 = smul.u32 32, %s24
        %p194 = scmp.lt.s32.totalorder %s22, 1
        %s195 = scalar_select %p194, %s22, 1
        %p196 = scmp.lt.s32.totalorder %s193, 31
        %s197 = scalar_select %p196, %s193, 31
        %s198 = smul.addr %s195, 32
        %s199 = sadd.s32 %s197, %s198
        %s200 = smul.addr %s199, 4
        %s201 = scalar_lea.vmem %s0, %s200
        %p202 = pneg %p59
        %p203 = pneg %p56
        %p204 = scmp.lt.s32.totalorder %s23, 0
        %s205 = scalar_select %p204, %s23, 0
        %s206 = smul.addr %s205, 4
        %s207 = scalar_lea.vmem %s1, %s206
        %p208 = pneg %p85
        %p209 = pneg %p82
        %p210 = scmp.lt.s32.totalorder %s23, 0
        %s211 = scalar_select %p210, %s23, 0
        %s212 = scalar_lea.vmem %s2, %s211
        %p213 = pneg %p111
        %p214 = pneg %p108
        %p215 = pneg %p141
        %p216 = pneg %p138
        %s217 = sand.u32 %s128, 1
        %s218 = scalar_lea.sflag [#allocation3], %s217
        %s219 = sand.u32 %s128, 1
        %s220 = smul.addr %s219, 256
        %s221 = scalar_lea.vmem [#allocation2], %s220
        %s222 = smul.u32 32, %s24
        %p223 = scmp.lt.s32.totalorder %s22, 1
        %s224 = scalar_select %p223, %s22, 1
        %p225 = scmp.lt.s32.totalorder %s222, 31
        %s226 = scalar_select %p225, %s222, 31
        %s227 = smul.addr %s224, 32
        %s228 = sadd.s32 %s226, %s227
        %s229 = smul.addr %s228, 4
        %s230 = scalar_lea.vmem %s0, %s229
        %s231 = smul.u32 32, %s24
        %p232 = scmp.lt.s32.totalorder %s23, 0
        %s233 = scalar_select %p232, %s23, 0
        %s234 = smul.addr %s233, 4
        %s235 = scalar_lea.vmem %s1, %s234
        %p236 = scmp.lt.s32.totalorder %s23, 0
        %s237 = scalar_select %p236, %s23, 0
        %s238 = scalar_lea.vmem %s2, %s237
        %s239 = smul.u32 32, %s24
        %v241 = vld [vmem:[%s230] sm:$0xf]
        %v242 = vld [vmem:[%s230 + $0x4] sm:$0xf]
        %v243 = vld [vmem:[%s230 + $0x8] sm:$0xf]
        %v244 = vld [vmem:[%s230 + $0xc] sm:$0xf]
        %v245 = vld [vmem:[%s230 + $0x10] sm:$0xf]
        %v246 = vld [vmem:[%s230 + $0x14] sm:$0xf]
        %v247 = vld [vmem:[%s230 + $0x18] sm:$0xf]
        %v248 = vld [vmem:[%s230 + $0x1c] sm:$0xf]
        %v249 = vld [vmem:[%s230 + $0x20] sm:$0xf]
        %v250 = vld [vmem:[%s230 + $0x24] sm:$0xf]
        %v251 = vld [vmem:[%s230 + $0x28] sm:$0xf]
        %v252 = vld [vmem:[%s230 + $0x2c] sm:$0xf]
        %v253 = vld [vmem:[%s230 + $0x30] sm:$0xf]
        %v254 = vld [vmem:[%s230 + $0x34] sm:$0xf]
        %v255 = vld [vmem:[%s230 + $0x38] sm:$0xf]
        %v256 = vld [vmem:[%s230 + $0x3c] sm:$0xf]
        %v257 = vld [vmem:[%s230 + $0x40] sm:$0xf]
        %v258 = vld [vmem:[%s230 + $0x44] sm:$0xf]
        %v259 = vld [vmem:[%s230 + $0x48] sm:$0xf]
        %v260 = vld [vmem:[%s230 + $0x4c] sm:$0xf]
        %v261 = vld [vmem:[%s230 + $0x50] sm:$0xf]
        %v262 = vld [vmem:[%s230 + $0x54] sm:$0xf]
        %v263 = vld [vmem:[%s230 + $0x58] sm:$0xf]
        %v264 = vld [vmem:[%s230 + $0x5c] sm:$0xf]
        %v265 = vld [vmem:[%s230 + $0x60] sm:$0xf]
        %v266 = vld [vmem:[%s230 + $0x64] sm:$0xf]
        %v267 = vld [vmem:[%s230 + $0x68] sm:$0xf]
        %v268 = vld [vmem:[%s230 + $0x6c] sm:$0xf]
        %v269 = vld [vmem:[%s230 + $0x70] sm:$0xf]
        %v270 = vld [vmem:[%s230 + $0x74] sm:$0xf]
        %v271 = vld [vmem:[%s230 + $0x78] sm:$0xf]
        %v272 = vld [vmem:[%s230 + $0x7c] sm:$0xf]
        %v273 = vld [vmem:[%s235] sm:$0xf]
        %v274 = vld [vmem:[%s235 + $0x4] sm:$0xf]
        %v275 = vld [vmem:[%s235 + $0x8] sm:$0xf]
        %v276 = vld [vmem:[%s235 + $0xc] sm:$0xf]
        %v277 = vld [vmem:[%s235 + $0x10] sm:$0xf]
        %v278 = vld [vmem:[%s238] sm:$0x1]
        %v280 = vlaneseq
        %v281 = vshrl.u32 %v280, 7
        %v282 = vsub.s32 0, %v281
        %v283 = vrot.slane %v278, %v282
        %v317 = vunpack.c.l.b16 %v241
        %v318 = vunpack.c.l.b16 %v242
        %v319 = vunpack.c.l.b16 %v243
        %v320 = vunpack.c.l.b16 %v244
        %v321 = vunpack.c.l.b16 %v245
        %v322 = vunpack.c.l.b16 %v246
        %v323 = vunpack.c.l.b16 %v247
        %v324 = vunpack.c.l.b16 %v248
        %v325 = vunpack.c.l.b16 %v249
        %v326 = vunpack.c.l.b16 %v250
        %v327 = vunpack.c.l.b16 %v251
        %v328 = vunpack.c.l.b16 %v252
        %v329 = vunpack.c.l.b16 %v253
        %v330 = vunpack.c.l.b16 %v254
        %v331 = vunpack.c.l.b16 %v255
        %v332 = vunpack.c.l.b16 %v256
        %v333 = vunpack.c.l.b16 %v257
        %v334 = vunpack.c.l.b16 %v258
        %v335 = vunpack.c.l.b16 %v259
        %v336 = vunpack.c.l.b16 %v260
        %v337 = vunpack.c.l.b16 %v261
        %v338 = vunpack.c.l.b16 %v262
        %v339 = vunpack.c.l.b16 %v263
        %v340 = vunpack.c.l.b16 %v264
        %v341 = vunpack.c.l.b16 %v265
        %v342 = vunpack.c.l.b16 %v266
        %v343 = vunpack.c.l.b16 %v267
        %v344 = vunpack.c.l.b16 %v268
        %v345 = vunpack.c.l.b16 %v269
        %v346 = vunpack.c.l.b16 %v270
        %v347 = vunpack.c.l.b16 %v271
        %v348 = vunpack.c.l.b16 %v272
        %v349 = vpack.c.b16 %v318, %v317
        %v350 = vpack.c.b16 %v320, %v319
        %v351 = vpack.c.b16 %v322, %v321
        %v352 = vpack.c.b16 %v324, %v323
        %v353 = vpack.c.b16 %v326, %v325
        %v354 = vpack.c.b16 %v328, %v327
        %v355 = vpack.c.b16 %v330, %v329
        %v356 = vpack.c.b16 %v332, %v331
        %v357 = vpack.c.b16 %v334, %v333
        %v358 = vpack.c.b16 %v336, %v335
        %v359 = vpack.c.b16 %v338, %v337
        %v360 = vpack.c.b16 %v340, %v339
        %v361 = vpack.c.b16 %v342, %v341
        %v362 = vpack.c.b16 %v344, %v343
        %v363 = vpack.c.b16 %v346, %v345
        %v364 = vpack.c.b16 %v348, %v347
        %v370 = vunpack.c.l.b16 %v273
        %v371 = vunpack.c.l.b16 %v274
        %v372 = vunpack.c.l.b16 %v275
        %v373 = vunpack.c.l.b16 %v276
        %v374 = vunpack.c.l.b16 %v277
        %v375 = vpack.c.b16 %v371, %v370
        %v376 = vpack.c.b16 %v373, %v372
        %v377 = vpack.c.b16 %v374, %v374
        %vm380 = vcmask 326656
        %v382 = vsel %vm380, %v349, 0
        %v385 = vsel %vm380, %v350, 0
        %v388 = vsel %vm380, %v351, 0
        %v391 = vsel %vm380, %v352, 0
        %v394 = vsel %vm380, %v353, 0
        %v397 = vsel %vm380, %v354, 0
        %v400 = vsel %vm380, %v355, 0
        %v403 = vsel %vm380, %v356, 0
        %v406 = vsel %vm380, %v357, 0
        %v409 = vsel %vm380, %v358, 0
        %v412 = vsel %vm380, %v359, 0
        %v415 = vsel %vm380, %v360, 0
        %v418 = vsel %vm380, %v361, 0
        %v421 = vsel %vm380, %v362, 0
        %v424 = vsel %vm380, %v363, 0
        %v427 = vsel %vm380, %v364, 0
        %vm429 = vcmask 1043456
        %v431 = vsel %vm429, %v377, 0
        %433 = vmatprep.subr.bf16.mxu0 0
        %434 = vmatpush1.bf16.msra.mxu0 %v375
        %435 = vmatprep.subr.bf16.mxu0 0
        %436 = vmatpush1.bf16.msra.mxu0 %v376
        %437 = vmatprep.subr.bf16.mxu0 0
        %438 = vmatpush1.bf16.msra.mxu0 %v431
        %439 = vmatprep.subr.bf16.mxu0 0
        %440 = vmatpush1.bf16.msra.mxu0 0
        %441 = vmatprep.subr.bf16.mxu0 0
        %442 = vmatpush1.bf16.msra.mxu0 0
        %443 = vmatprep.subr.bf16.mxu0 0
        %444 = vmatpush1.bf16.msra.mxu0 0
        %445 = vmatprep.subr.bf16.mxu0 0
        %446 = vmatpush1.bf16.msra.mxu0 0
        %447 = vmatprep.subr.bf16.mxu0 0
        %448 = vmatpush1.bf16.msra.mxu0 0
        %449 = vmatprep.subr.bf16.mxu0 0
        %450 = vmatpush1.bf16.msra.mxu0 0
        %451 = vmatprep.subr.bf16.mxu0 0
        %452 = vmatpush1.bf16.msra.mxu0 0
        %453 = vmatprep.subr.bf16.mxu0 0
        %454 = vmatpush1.bf16.msra.mxu0 0
        %455 = vmatprep.subr.bf16.mxu0 0
        %456 = vmatpush1.bf16.msra.mxu0 0
        %457 = vmatprep.subr.bf16.mxu0 0
        %458 = vmatpush1.bf16.msra.mxu0 0
        %459 = vmatprep.subr.bf16.mxu0 0
        %460 = vmatpush1.bf16.msra.mxu0 0
        %461 = vmatprep.subr.bf16.mxu0 0
        %462 = vmatpush1.bf16.msra.mxu0 0
        %463 = vmatprep.subr.bf16.mxu0 0
        %464 = vmatpush1.bf16.msra.mxu0 0
        %465 = vmatprep.mubr.bf16.mxu0 0
        %466 = vmatmul.mubr.bf16.gmra.mrb[0].mxu0 %v382
        %v467 = vpop.f32.mrb[0].mxu0
        %v468 = vadd.f32 %v283, %v467
        %v469 = vpop.f32.mrb[0].mxu0
        %v470 = vpop.f32.mrb[0].mxu0
        %v471 = vadd.f32 %v283, %v470
        %v472 = vpop.f32.mrb[0].mxu0
        %473 = vmatprep.mubr.bf16.mxu0 0
        %474 = vmatmul.mubr.bf16.gmra.mrb[0].mxu0 %v385
        %v475 = vpop.f32.mrb[0].mxu0
        %v476 = vadd.f32 %v283, %v475
        %v477 = vpop.f32.mrb[0].mxu0
        %v478 = vpop.f32.mrb[0].mxu0
        %v479 = vadd.f32 %v283, %v478
        %v480 = vpop.f32.mrb[0].mxu0
        %481 = vmatprep.mubr.bf16.mxu0 0
        %482 = vmatmul.mubr.bf16.gmra.mrb[0].mxu0 %v388
        %v483 = vpop.f32.mrb[0].mxu0
        %v484 = vadd.f32 %v283, %v483
        %v485 = vpop.f32.mrb[0].mxu0
        %v486 = vpop.f32.mrb[0].mxu0
        %v487 = vadd.f32 %v283, %v486
        %v488 = vpop.f32.mrb[0].mxu0
        %489 = vmatprep.mubr.bf16.mxu0 0
        %490 = vmatmul.mubr.bf16.gmra.mrb[0].mxu0 %v391
        %v491 = vpop.f32.mrb[0].mxu0
        %v492 = vadd.f32 %v283, %v491
        %v493 = vpop.f32.mrb[0].mxu0
        %v494 = vpop.f32.mrb[0].mxu0
        %v495 = vadd.f32 %v283, %v494
        %v496 = vpop.f32.mrb[0].mxu0
        %497 = vmatprep.mubr.bf16.mxu0 0
        %498 = vmatmul.mubr.bf16.gmra.mrb[0].mxu0 %v394
        %v499 = vpop.f32.mrb[0].mxu0
        %v500 = vadd.f32 %v283, %v499
        %v501 = vpop.f32.mrb[0].mxu0
        %v502 = vpop.f32.mrb[0].mxu0
        %v503 = vadd.f32 %v283, %v502
        %v504 = vpop.f32.mrb[0].mxu0
        %505 = vmatprep.mubr.bf16.mxu0 0
        %506 = vmatmul.mubr.bf16.gmra.mrb[0].mxu0 %v397
        %v507 = vpop.f32.mrb[0].mxu0
        %v508 = vadd.f32 %v283, %v507
        %v509 = vpop.f32.mrb[0].mxu0
        %v510 = vpop.f32.mrb[0].mxu0
        %v511 = vadd.f32 %v283, %v510
        %v512 = vpop.f32.mrb[0].mxu0
        %513 = vmatprep.mubr.bf16.mxu0 0
        %514 = vmatmul.mubr.bf16.gmra.mrb[0].mxu0 %v400
        %v515 = vpop.f32.mrb[0].mxu0
        %v516 = vadd.f32 %v283, %v515
        %v517 = vpop.f32.mrb[0].mxu0
        %v518 = vpop.f32.mrb[0].mxu0
        %v519 = vadd.f32 %v283, %v518
        %v520 = vpop.f32.mrb[0].mxu0
        %521 = vmatprep.mubr.bf16.mxu0 0
        %522 = vmatmul.mubr.bf16.gmra.mrb[0].mxu0 %v403
        %v523 = vpop.f32.mrb[0].mxu0
        %v524 = vadd.f32 %v283, %v523
        %v525 = vpop.f32.mrb[0].mxu0
        %v526 = vpop.f32.mrb[0].mxu0
        %v527 = vadd.f32 %v283, %v526
        %v528 = vpop.f32.mrb[0].mxu0
        %529 = vmatprep.mubr.bf16.mxu0 0
        %530 = vmatmul.mubr.bf16.gmra.mrb[0].mxu0 %v406
        %v531 = vpop.f32.mrb[0].mxu0
        %v532 = vadd.f32 %v283, %v531
        %v533 = vpop.f32.mrb[0].mxu0
        %v534 = vpop.f32.mrb[0].mxu0
        %v535 = vadd.f32 %v283, %v534
        %v536 = vpop.f32.mrb[0].mxu0
        %537 = vmatprep.mubr.bf16.mxu0 0
        %538 = vmatmul.mubr.bf16.gmra.mrb[0].mxu0 %v409
        %v539 = vpop.f32.mrb[0].mxu0
        %v540 = vadd.f32 %v283, %v539
        %v541 = vpop.f32.mrb[0].mxu0
        %v542 = vpop.f32.mrb[0].mxu0
        %v543 = vadd.f32 %v283, %v542
        %v544 = vpop.f32.mrb[0].mxu0
        %545 = vmatprep.mubr.bf16.mxu0 0
        %546 = vmatmul.mubr.bf16.gmra.mrb[0].mxu0 %v412
        %v547 = vpop.f32.mrb[0].mxu0
        %v548 = vadd.f32 %v283, %v547
        %v549 = vpop.f32.mrb[0].mxu0
        %v550 = vpop.f32.mrb[0].mxu0
        %v551 = vadd.f32 %v283, %v550
        %v552 = vpop.f32.mrb[0].mxu0
        %553 = vmatprep.mubr.bf16.mxu0 0
        %554 = vmatmul.mubr.bf16.gmra.mrb[0].mxu0 %v415
        %v555 = vpop.f32.mrb[0].mxu0
        %v556 = vadd.f32 %v283, %v555
        %v557 = vpop.f32.mrb[0].mxu0
        %v558 = vpop.f32.mrb[0].mxu0
        %v559 = vadd.f32 %v283, %v558
        %v560 = vpop.f32.mrb[0].mxu0
        %561 = vmatprep.mubr.bf16.mxu0 0
        %562 = vmatmul.mubr.bf16.gmra.mrb[0].mxu0 %v418
        %v563 = vpop.f32.mrb[0].mxu0
        %v564 = vadd.f32 %v283, %v563
        %v565 = vpop.f32.mrb[0].mxu0
        %v566 = vpop.f32.mrb[0].mxu0
        %v567 = vadd.f32 %v283, %v566
        %v568 = vpop.f32.mrb[0].mxu0
        %569 = vmatprep.mubr.bf16.mxu0 0
        %570 = vmatmul.mubr.bf16.gmra.mrb[0].mxu0 %v421
        %v571 = vpop.f32.mrb[0].mxu0
        %v572 = vadd.f32 %v283, %v571
        %v573 = vpop.f32.mrb[0].mxu0
        %v574 = vpop.f32.mrb[0].mxu0
        %v575 = vadd.f32 %v283, %v574
        %v576 = vpop.f32.mrb[0].mxu0
        %577 = vmatprep.mubr.bf16.mxu0 0
        %578 = vmatmul.mubr.bf16.gmra.mrb[0].mxu0 %v424
        %v579 = vpop.f32.mrb[0].mxu0
        %v580 = vadd.f32 %v283, %v579
        %v581 = vpop.f32.mrb[0].mxu0
        %v582 = vpop.f32.mrb[0].mxu0
        %v583 = vadd.f32 %v283, %v582
        %v584 = vpop.f32.mrb[0].mxu0
        %585 = vmatprep.mubr.bf16.mxu0 0
        %586 = vmatmul.mubr.bf16.gmra.mrb[0].mxu0 %v427
        %v587 = vpop.f32.mrb[0].mxu0
        %v588 = vadd.f32 %v283, %v587
        %v589 = vpop.f32.mrb[0].mxu0
        %v590 = vpop.f32.mrb[0].mxu0
        %v591 = vadd.f32 %v283, %v590
        %v592 = vpop.f32.mrb[0].mxu0
        %593 = vdwg.mxu0
        %v594 = vmax.f32 %v468, 0.0
        %v595 = vmax.f32 %v471, 0.0
        %v596 = vmax.f32 %v476, 0.0
        %v597 = vmax.f32 %v479, 0.0
        %v598 = vmax.f32 %v484, 0.0
        %v599 = vmax.f32 %v487, 0.0
        %v600 = vmax.f32 %v492, 0.0
        %v601 = vmax.f32 %v495, 0.0
        %v602 = vmax.f32 %v500, 0.0
        %v603 = vmax.f32 %v503, 0.0
        %v604 = vmax.f32 %v508, 0.0
        %v605 = vmax.f32 %v511, 0.0
        %v606 = vmax.f32 %v516, 0.0
        %v607 = vmax.f32 %v519, 0.0
        %v608 = vmax.f32 %v524, 0.0
        %v609 = vmax.f32 %v527, 0.0
        %v610 = vmax.f32 %v532, 0.0
        %v611 = vmax.f32 %v535, 0.0
        %v612 = vmax.f32 %v540, 0.0
        %v613 = vmax.f32 %v543, 0.0
        %v614 = vmax.f32 %v548, 0.0
        %v615 = vmax.f32 %v551, 0.0
        %v616 = vmax.f32 %v556, 0.0
        %v617 = vmax.f32 %v559, 0.0
        %v618 = vmax.f32 %v564, 0.0
        %v619 = vmax.f32 %v567, 0.0
        %v620 = vmax.f32 %v572, 0.0
        %v621 = vmax.f32 %v575, 0.0
        %v622 = vmax.f32 %v580, 0.0
        %v623 = vmax.f32 %v583, 0.0
        %v624 = vmax.f32 %v588, 0.0
        %v625 = vmax.f32 %v591, 0.0
        %626 = vst [vmem:[%s221] sm:$0xff] %v594
        %627 = vst [vmem:[%s221 + $0x8] sm:$0xff] %v595
        %628 = vst [vmem:[%s221 + $0x10] sm:$0xff] %v596
        %629 = vst [vmem:[%s221 + $0x18] sm:$0xff] %v597
        %630 = vst [vmem:[%s221 + $0x20] sm:$0xff] %v598
        %631 = vst [vmem:[%s221 + $0x28] sm:$0xff] %v599
        %632 = vst [vmem:[%s221 + $0x30] sm:$0xff] %v600
        %633 = vst [vmem:[%s221 + $0x38] sm:$0xff] %v601
        %634 = vst [vmem:[%s221 + $0x40] sm:$0xff] %v602
        %635 = vst [vmem:[%s221 + $0x48] sm:$0xff] %v603
        %636 = vst [vmem:[%s221 + $0x50] sm:$0xff] %v604
        %637 = vst [vmem:[%s221 + $0x58] sm:$0xff] %v605
        %638 = vst [vmem:[%s221 + $0x60] sm:$0xff] %v606
        %639 = vst [vmem:[%s221 + $0x68] sm:$0xff] %v607
        %640 = vst [vmem:[%s221 + $0x70] sm:$0xff] %v608
        %641 = vst [vmem:[%s221 + $0x78] sm:$0xff] %v609
        %642 = vst [vmem:[%s221 + $0x80] sm:$0xff] %v610
        %643 = vst [vmem:[%s221 + $0x88] sm:$0xff] %v611
        %644 = vst [vmem:[%s221 + $0x90] sm:$0xff] %v612
        %645 = vst [vmem:[%s221 + $0x98] sm:$0xff] %v613
        %646 = vst [vmem:[%s221 + $0xa0] sm:$0xff] %v614
        %647 = vst [vmem:[%s221 + $0xa8] sm:$0xff] %v615
        %648 = vst [vmem:[%s221 + $0xb0] sm:$0xff] %v616
        %649 = vst [vmem:[%s221 + $0xb8] sm:$0xff] %v617
        %650 = vst [vmem:[%s221 + $0xc0] sm:$0xff] %v618
        %651 = vst [vmem:[%s221 + $0xc8] sm:$0xff] %v619
        %652 = vst [vmem:[%s221 + $0xd0] sm:$0xff] %v620
        %653 = vst [vmem:[%s221 + $0xd8] sm:$0xff] %v621
        %654 = vst [vmem:[%s221 + $0xe0] sm:$0xff] %v622
        %655 = vst [vmem:[%s221 + $0xe8] sm:$0xff] %v623
        %656 = vst [vmem:[%s221 + $0xf0] sm:$0xff] %v624
        %657 = vst [vmem:[%s221 + $0xf8] sm:$0xff] %v625
        %s658 = sand.u32 %s128, 1
        %s659 = scalar_lea.sflag [#allocation3], %s658
        %s660 = sand.u32 %s128, 1
        %s661 = smul.addr %s660, 256
        %s662 = scalar_lea.vmem [#allocation2], %s661
        // Predicated region
        $region33: #{tpu_custom_call.1} parent=31 // pred_check
          %p663 = pneg %p138
        $region34: #{tpu_custom_call.1} parent=31 // pred_check_branch
          %665 = sbr.rel (%p663) target = $region36
        $region35: #{tpu_custom_call.1} parent=31 // pred_region
          %s666 = smul.u32 32, %s24
          %s668 = ssub.s32 4096, 4096
          %669 = vsyncadd %s659, %s668
          %s670 = sadd.s32 %s23, %s666
          %s671 = smul.addr %s22, 32
          %s672 = sadd.s32 %s670, %s671
          %s673 = smul.addr %s672, 128
          %s674 = scalar_lea.hbm %s3, %s673
          %s675 = sshll.u32 %s662, 4
          %s676 = int_to_ptr.vmem [resolvable:$true] %s675
          %681 = dma.vmem_to_hbm [thread:$0]  %s676, 4096, %s674, %s659, 128, 128, 8
        $region36: #{tpu_custom_call.1} parent=31 // pred_fallthru
          _
      $region32: #{tpu_custom_call.1} parent=5 // pred_fallthru
        _
      %p682 = scmp.le.s32.totalorder 2, %s12
      // Predicated region
      $region37: #{tpu_custom_call.1} parent=5 // pred_check
        %p683 = pneg %p682
      $region38: #{tpu_custom_call.1} parent=5 // pred_check_branch
        %685 = sbr.rel (%p683) target = $region40
      $region39: #{tpu_custom_call.1} parent=5 // pred_region
        %s686 = ssub.s32 %s12, 2
        // Predicated region
        $region41: #{tpu_custom_call.1} parent=39 // pred_check
          %p687 = pneg %p144
        $region42: #{tpu_custom_call.1} parent=39 // pred_check_branch
          %689 = sbr.rel (%p687) target = $region44
        $region43: #{tpu_custom_call.1} parent=39 // pred_region
          %s690 = sand.u32 %s129, 1
          %s691 = scalar_lea.sflag [#allocation3], %s690
          %s692 = sand.u32 %s129, 1
          %s693 = smul.addr %s692, 256
          %s694 = scalar_lea.vmem [#allocation2], %s693
          %695 = dma.done %s691, 4096
        $region44: #{tpu_custom_call.1} parent=39 // pred_fallthru
          _
      $region40: #{tpu_custom_call.1} parent=5 // pred_fallthru
        _
    $region6: #{tpu_custom_call.1} parent=1 // loop_footer
      %s16 = sadd.s32 1, %s12
    $region7: #{tpu_custom_call.1} parent=1 // loop_footer_branch
      %11 = sbr.rel target = $region3
    $region8: #{tpu_custom_call.1} parent=1 // loop_exit
      _
    %696 = vsyncpa [#allocation3], 1
    %s697 = scalar_lea.sflag [#allocation3], 1
    %698 = vsyncpa %s697, 1

</llo_original>
